<compile_context>
chip_gen: v5e
topology: v5e:2x2
jax: 0.10.0
libtpu: 0.0.40
codegen_flags: <defaults>
</compile_context>

<pallas_src>
import functools

import jax
import jax.numpy as jnp
from jax.experimental import pallas as pl
from jax.experimental.pallas import tpu as pltpu

_LANE = 128


def _round_up(x, m):
    return -(-x // m) * m


def _pad2(a, rows, cols):
    return jnp.pad(a, ((0, rows - a.shape[0]), (0, cols - a.shape[1])))


def _latent_model_kernel(n_action_layers, n_model_extra, *refs):
    """One batch tile of the fused Latent_Model forward.

    refs = (scale_shift_smem,                       # (2,) f32 in SMEM
            mask, latent, first_latent,             # (TILE_B, *) bf16 tiles
            W_a0, b_a0, ..., W_a{A-1}, b_a{A-1},    # action MLP (VMEM-resident)
            W_m0_x, W_m0_l, W_m0_f, b_m0,           # first model layer, split weight
            W_m1, b_m1, ..., W_m{E}, b_m{E},        # remaining model layers
            out)                                    # (TILE_B, out_p) f32 tile
    """
    it = iter(refs)
    ss_ref = next(it)
    mask_ref = next(it)
    latent_ref = next(it)
    first_ref = next(it)
    action_params = [(next(it), next(it)) for _ in range(n_action_layers)]
    w0x_ref, w0l_ref, w0f_ref, b0_ref = next(it), next(it), next(it), next(it)
    model_params = [(next(it), next(it)) for _ in range(n_model_extra)]
    out_ref = next(it)

    bf16 = jnp.bfloat16
    f32 = jnp.float32

    # ---- action_model: Linear->ReLU, Linear->ReLU, Linear (no ReLU on last) ----
    x = mask_ref[...].astype(bf16)
    for i, (w_ref, b_ref) in enumerate(action_params):
        y = jnp.dot(x, w_ref[...], preferred_element_type=f32) + b_ref[...]
        if i < n_action_layers - 1:
            y = jnp.maximum(y, 0.0)
        x = y.astype(bf16)

    # ---- first model layer: concat replaced by split-weight sum of dots ----
    h = (jnp.dot(x, w0x_ref[...], preferred_element_type=f32)
         + jnp.dot(latent_ref[...].astype(bf16), w0l_ref[...],
                   preferred_element_type=f32)
         + jnp.dot(first_ref[...].astype(bf16), w0f_ref[...],
                   preferred_element_type=f32)
         + b0_ref[...])
    if n_model_extra > 0:
        h = jnp.maximum(h, 0.0)

    # ---- remaining model layers: Linear->ReLU ... Linear ----
    for i, (w_ref, b_ref) in enumerate(model_params):
        h = jnp.dot(h.astype(bf16), w_ref[...], preferred_element_type=f32) + b_ref[...]
        if i < n_model_extra - 1:
            h = jnp.maximum(h, 0.0)

    # ---- sigmoid * scale + shift (f32 epilogue) ----
    out_ref[...] = jax.nn.sigmoid(h) * ss_ref[0] + ss_ref[1]


def latent_model_forward(mask, latent, first_latent, action_params, model_params,
                         *, normalize=True, use_img=False):
    if normalize:
        scale, shift = 2.0, -1.0
    elif use_img:
        scale, shift = 6.0, -3.0
    else:
        scale, shift = 200.0, -100.0
    scale_shift = jnp.array([scale, shift], jnp.float32)

    batch, num_actions = mask.shape
    latent_size = latent.shape[1]
    out_features = model_params[-1][0].shape[1]

    na_p = _round_up(num_actions, _LANE)
    ls_p = _round_up(latent_size, _LANE)
    out_p = _round_up(out_features, _LANE)

    # Batch tiling: small batches become a single (8-aligned) tile; large
    # batches get 512-row tiles pipelined over a parallel grid axis.
    tile_b = min(512, _round_up(batch, 8))
    batch_p = _round_up(batch, tile_b)
    grid = (batch_p // tile_b,)

    # Activation inputs: zero-pad to lane-aligned widths, bf16, tiled over batch.
    mask_p = _pad2(mask.astype(jnp.bfloat16), batch_p, na_p)
    latent_p = _pad2(latent.astype(jnp.bfloat16), batch_p, ls_p)
    first_p = _pad2(first_latent.astype(jnp.bfloat16), batch_p, ls_p)

    flat_params = []

    # Action MLP params: pad both dims to 128 multiples; bf16 weights, f32 bias.
    for w, b in action_params:
        fi_p = _round_up(w.shape[0], _LANE)
        fo_p = _round_up(w.shape[1], _LANE)
        flat_params.append(_pad2(w, fi_p, fo_p).astype(jnp.bfloat16))
        flat_params.append(_pad2(jnp.reshape(b, (1, -1)).astype(jnp.float32), 1, fo_p))

    # Model layer 0: split weight rows (action_out | latent | first_latent).
    w0, b0 = model_params[0]
    h1_p = _round_up(w0.shape[1], _LANE)
    for blk in (w0[:latent_size], w0[latent_size:2 * latent_size],
                w0[2 * latent_size:]):
        flat_params.append(_pad2(blk, ls_p, h1_p).astype(jnp.bfloat16))
    flat_params.append(_pad2(jnp.reshape(b0, (1, -1)).astype(jnp.float32), 1, h1_p))

    # Remaining model layers.
    for w, b in model_params[1:]:
        fi_p = _round_up(w.shape[0], _LANE)
        fo_p = _round_up(w.shape[1], _LANE)
        flat_params.append(_pad2(w, fi_p, fo_p).astype(jnp.bfloat16))
        flat_params.append(_pad2(jnp.reshape(b, (1, -1)).astype(jnp.float32), 1, fo_p))

    kernel = functools.partial(_latent_model_kernel, len(action_params),
                               len(model_params) - 1)

    batch_specs = [
        pl.BlockSpec((tile_b, na_p), lambda i: (i, 0)),
        pl.BlockSpec((tile_b, ls_p), lambda i: (i, 0)),
        pl.BlockSpec((tile_b, ls_p), lambda i: (i, 0)),
    ]
    # Weights/biases: full-array blocks, constant index map -> VMEM-resident
    # across all grid steps (no re-DMA).
    param_specs = [pl.BlockSpec(p.shape, lambda i: (0, 0)) for p in flat_params]

    out_padded = pl.pallas_call(
        kernel,
        out_shape=jax.ShapeDtypeStruct((batch_p, out_p), jnp.float32),
        grid=grid,
        in_specs=[pl.BlockSpec(memory_space=pltpu.MemorySpace.SMEM)]
                 + batch_specs + param_specs,
        out_specs=pl.BlockSpec((tile_b, out_p), lambda i: (i, 0)),
        compiler_params=pltpu.CompilerParams(
            dimension_semantics=("parallel",),
            vmem_limit_bytes=32 * 1024 * 1024,
        ),
    )(scale_shift, mask_p, latent_p, first_p, *flat_params)

    return out_padded[:batch, :out_features]


def _init_linear(key, fan_in, fan_out):
    # PyTorch default Linear init: U(-1/sqrt(fan_in), 1/sqrt(fan_in))
    kw, kb = jax.random.split(key)
    bound = 1.0 / jnp.sqrt(fan_in)
    w = jax.random.uniform(kw, (fan_in, fan_out), jnp.float32, -bound, bound)
    b = jax.random.uniform(kb, (1, fan_out), jnp.float32, -bound, bound)
    return w, b


def _reference_forward(mask, latent, first_latent, action_params, model_params,
                       scale, shift):
    x = mask
    for i, (w, b) in enumerate(action_params):
        x = x @ w + b
        if i < len(action_params) - 1:
            x = jnp.maximum(x, 0.0)
    h = jnp.concatenate([x, latent, first_latent], axis=-1)
    for i, (w, b) in enumerate(model_params):
        h = h @ w + b
        if i < len(model_params) - 1:
            h = jnp.maximum(h, 0.0)
    return jax.nn.sigmoid(h) * scale + shift


if __name__ == "__main__":
    # Small synthetic config (stands in for args / utils.load_model_config)
    batch = 2
    num_actions = 8        # args.num_actions
    latent_size = 32       # encoding_size from the auto-encoder config
    hidden_dim = 32        # args.hidden_dim
    n_layers = 2           # args.layers
    normalize = True       # args.normalize branch -> sigmoid*2 - 1

    key = jax.random.PRNGKey(0)
    keys = jax.random.split(key, 16)

    # action_model: num_actions -> 200 -> 100 -> latent_size
    action_dims = [num_actions, 200, 100, latent_size]
    action_params = [
        _init_linear(keys[i], action_dims[i], action_dims[i + 1])
        for i in range(len(action_dims) - 1)
    ]

    # model: [latent_size*3] + [hidden_dim]*(layers-1) + [num_actions]
    hidden_sizes = [latent_size * 3] + [hidden_dim] * (n_layers - 1) + [num_actions]
    model_params = [
        _init_linear(keys[4 + i], hidden_sizes[i], hidden_sizes[i + 1])
        for i in range(n_layers)
    ]

    # obs dict inputs
    mask = jax.random.uniform(keys[10], (batch, num_actions), jnp.float32)
    latent = jax.random.normal(keys[11], (batch, latent_size), jnp.float32)
    first_latent = jax.random.normal(keys[12], (batch, latent_size), jnp.float32)

    out = latent_model_forward(
        mask, latent, first_latent, action_params, model_params,
        normalize=normalize, use_img=False,
    )
    out = jax.block_until_ready(out)

    ref = _reference_forward(mask, latent, first_latent, action_params,
                             model_params, 2.0, -1.0)
    assert out.shape == (batch, num_actions)
    # bf16 matmul operands with f32 accumulation vs. full-f32 reference.
    assert jnp.allclose(out, ref, atol=3e-2), "mismatch vs pure-JAX reference"

    print("KERNEL_OK")
</pallas_src>

<mosaic_0001>
module attributes {stable_mosaic.version = 11 : i64} {
  func.func @_latent_model_kernel(%arg0: i32, %arg1: memref<2xf32, #tpu.memory_space<smem>>, %arg2: memref<8x128xbf16, #tpu.memory_space<vmem>>, %arg3: memref<8x128xbf16, #tpu.memory_space<vmem>>, %arg4: memref<8x128xbf16, #tpu.memory_space<vmem>>, %arg5: memref<128x256xbf16, #tpu.memory_space<vmem>>, %arg6: memref<1x256xf32, #tpu.memory_space<vmem>>, %arg7: memref<256x128xbf16, #tpu.memory_space<vmem>>, %arg8: memref<1x128xf32, #tpu.memory_space<vmem>>, %arg9: memref<128x128xbf16, #tpu.memory_space<vmem>>, %arg10: memref<1x128xf32, #tpu.memory_space<vmem>>, %arg11: memref<128x128xbf16, #tpu.memory_space<vmem>>, %arg12: memref<128x128xbf16, #tpu.memory_space<vmem>>, %arg13: memref<128x128xbf16, #tpu.memory_space<vmem>>, %arg14: memref<1x128xf32, #tpu.memory_space<vmem>>, %arg15: memref<128x128xbf16, #tpu.memory_space<vmem>>, %arg16: memref<1x128xf32, #tpu.memory_space<vmem>>, %arg17: memref<8x128xf32, #tpu.memory_space<vmem>>) attributes {dimension_semantics = [#tpu.dimension_semantics<parallel>], iteration_bounds = array<i64: 1>, scalar_prefetch = 0 : i64, scratch_operands = 0 : i64, tpu.core_type = #tpu.core_type<tc>, window_params = [{transform_indices = @transform_0, window_bounds = array<i64: 2>}, {transform_indices = @transform_1, window_bounds = array<i64: 8, 128>}, {transform_indices = @transform_2, window_bounds = array<i64: 8, 128>}, {transform_indices = @transform_3, window_bounds = array<i64: 8, 128>}, {pipeline_mode = #tpu.pipeline_mode<synchronous>, transform_indices = @transform_4, window_bounds = array<i64: 128, 256>}, {pipeline_mode = #tpu.pipeline_mode<synchronous>, transform_indices = @transform_5, window_bounds = array<i64: 1, 256>}, {pipeline_mode = #tpu.pipeline_mode<synchronous>, transform_indices = @transform_6, window_bounds = array<i64: 256, 128>}, {pipeline_mode = #tpu.pipeline_mode<synchronous>, transform_indices = @transform_7, window_bounds = array<i64: 1, 128>}, {pipeline_mode = #tpu.pipeline_mode<synchronous>, transform_indices = @transform_8, window_bounds = array<i64: 128, 128>}, {pipeline_mode = #tpu.pipeline_mode<synchronous>, transform_indices = @transform_9, window_bounds = array<i64: 1, 128>}, {pipeline_mode = #tpu.pipeline_mode<synchronous>, transform_indices = @transform_10, window_bounds = array<i64: 128, 128>}, {pipeline_mode = #tpu.pipeline_mode<synchronous>, transform_indices = @transform_11, window_bounds = array<i64: 128, 128>}, {pipeline_mode = #tpu.pipeline_mode<synchronous>, transform_indices = @transform_12, window_bounds = array<i64: 128, 128>}, {pipeline_mode = #tpu.pipeline_mode<synchronous>, transform_indices = @transform_13, window_bounds = array<i64: 1, 128>}, {pipeline_mode = #tpu.pipeline_mode<synchronous>, transform_indices = @transform_14, window_bounds = array<i64: 128, 128>}, {pipeline_mode = #tpu.pipeline_mode<synchronous>, transform_indices = @transform_15, window_bounds = array<i64: 1, 128>}, {transform_indices = @transform_16, window_bounds = array<i64: 8, 128>}]} {
    %c0 = arith.constant 0 : index
    %c0_0 = arith.constant 0 : index
    %0 = vector.load %arg2[%c0, %c0_0] : memref<8x128xbf16, #tpu.memory_space<vmem>>, vector<8x128xbf16>
    %c0_1 = arith.constant 0 : index
    %c0_2 = arith.constant 0 : index
    %1 = vector.load %arg5[%c0_1, %c0_2] : memref<128x256xbf16, #tpu.memory_space<vmem>>, vector<128x256xbf16>
    %cst = arith.constant dense<0.000000e+00> : vector<8x256xf32>
    %2 = tpu.matmul %0, %1, %cst {dimension_numbers = #tpu.dot_dimension_numbers<[1], [0], [0], [1], [0, 0, 1, 1], [], []>} : vector<8x128xbf16>, vector<128x256xbf16>, vector<8x256xf32> -> vector<8x256xf32>
    %c0_3 = arith.constant 0 : index
    %c0_4 = arith.constant 0 : index
    %3 = vector.load %arg6[%c0_3, %c0_4] : memref<1x256xf32, #tpu.memory_space<vmem>>, vector<1x256xf32>
    %4 = vector.broadcast %3 : vector<1x256xf32> to vector<8x256xf32>
    %5 = arith.addf %2, %4 : vector<8x256xf32>
    %cst_5 = arith.constant 0.000000e+00 : f32
    %6 = vector.broadcast %cst_5 : f32 to vector<8x256xf32>
    %7 = arith.maximumf %5, %6 : vector<8x256xf32>
    %8 = arith.truncf %7 : vector<8x256xf32> to vector<8x256xbf16>
    %c0_6 = arith.constant 0 : index
    %c0_7 = arith.constant 0 : index
    %9 = vector.load %arg7[%c0_6, %c0_7] : memref<256x128xbf16, #tpu.memory_space<vmem>>, vector<256x128xbf16>
    %cst_8 = arith.constant dense<0.000000e+00> : vector<8x128xf32>
    %10 = tpu.matmul %8, %9, %cst_8 {dimension_numbers = #tpu.dot_dimension_numbers<[1], [0], [0], [1], [0, 0, 1, 1], [], []>} : vector<8x256xbf16>, vector<256x128xbf16>, vector<8x128xf32> -> vector<8x128xf32>
    %c0_9 = arith.constant 0 : index
    %c0_10 = arith.constant 0 : index
    %11 = vector.load %arg8[%c0_9, %c0_10] : memref<1x128xf32, #tpu.memory_space<vmem>>, vector<1x128xf32>
    %12 = vector.broadcast %11 : vector<1x128xf32> to vector<8x128xf32>
    %13 = arith.addf %10, %12 : vector<8x128xf32>
    %cst_11 = arith.constant 0.000000e+00 : f32
    %14 = vector.broadcast %cst_11 : f32 to vector<8x128xf32>
    %15 = arith.maximumf %13, %14 : vector<8x128xf32>
    %16 = arith.truncf %15 : vector<8x128xf32> to vector<8x128xbf16>
    %c0_12 = arith.constant 0 : index
    %c0_13 = arith.constant 0 : index
    %17 = vector.load %arg9[%c0_12, %c0_13] : memref<128x128xbf16, #tpu.memory_space<vmem>>, vector<128x128xbf16>
    %cst_14 = arith.constant dense<0.000000e+00> : vector<8x128xf32>
    %18 = tpu.matmul %16, %17, %cst_14 {dimension_numbers = #tpu.dot_dimension_numbers<[1], [0], [0], [1], [0, 0, 1, 1], [], []>} : vector<8x128xbf16>, vector<128x128xbf16>, vector<8x128xf32> -> vector<8x128xf32>
    %c0_15 = arith.constant 0 : index
    %c0_16 = arith.constant 0 : index
    %19 = vector.load %arg10[%c0_15, %c0_16] : memref<1x128xf32, #tpu.memory_space<vmem>>, vector<1x128xf32>
    %20 = vector.broadcast %19 : vector<1x128xf32> to vector<8x128xf32>
    %21 = arith.addf %18, %20 : vector<8x128xf32>
    %22 = arith.truncf %21 : vector<8x128xf32> to vector<8x128xbf16>
    %c0_17 = arith.constant 0 : index
    %c0_18 = arith.constant 0 : index
    %23 = vector.load %arg11[%c0_17, %c0_18] : memref<128x128xbf16, #tpu.memory_space<vmem>>, vector<128x128xbf16>
    %cst_19 = arith.constant dense<0.000000e+00> : vector<8x128xf32>
    %24 = tpu.matmul %22, %23, %cst_19 {dimension_numbers = #tpu.dot_dimension_numbers<[1], [0], [0], [1], [0, 0, 1, 1], [], []>} : vector<8x128xbf16>, vector<128x128xbf16>, vector<8x128xf32> -> vector<8x128xf32>
    %c0_20 = arith.constant 0 : index
    %c0_21 = arith.constant 0 : index
    %25 = vector.load %arg3[%c0_20, %c0_21] : memref<8x128xbf16, #tpu.memory_space<vmem>>, vector<8x128xbf16>
    %c0_22 = arith.constant 0 : index
    %c0_23 = arith.constant 0 : index
    %26 = vector.load %arg12[%c0_22, %c0_23] : memref<128x128xbf16, #tpu.memory_space<vmem>>, vector<128x128xbf16>
    %cst_24 = arith.constant dense<0.000000e+00> : vector<8x128xf32>
    %27 = tpu.matmul %25, %26, %cst_24 {dimension_numbers = #tpu.dot_dimension_numbers<[1], [0], [0], [1], [0, 0, 1, 1], [], []>} : vector<8x128xbf16>, vector<128x128xbf16>, vector<8x128xf32> -> vector<8x128xf32>
    %28 = arith.addf %24, %27 : vector<8x128xf32>
    %c0_25 = arith.constant 0 : index
    %c0_26 = arith.constant 0 : index
    %29 = vector.load %arg4[%c0_25, %c0_26] : memref<8x128xbf16, #tpu.memory_space<vmem>>, vector<8x128xbf16>
    %c0_27 = arith.constant 0 : index
    %c0_28 = arith.constant 0 : index
    %30 = vector.load %arg13[%c0_27, %c0_28] : memref<128x128xbf16, #tpu.memory_space<vmem>>, vector<128x128xbf16>
    %cst_29 = arith.constant dense<0.000000e+00> : vector<8x128xf32>
    %31 = tpu.matmul %29, %30, %cst_29 {dimension_numbers = #tpu.dot_dimension_numbers<[1], [0], [0], [1], [0, 0, 1, 1], [], []>} : vector<8x128xbf16>, vector<128x128xbf16>, vector<8x128xf32> -> vector<8x128xf32>
    %32 = arith.addf %28, %31 : vector<8x128xf32>
    %c0_30 = arith.constant 0 : index
    %c0_31 = arith.constant 0 : index
    %33 = vector.load %arg14[%c0_30, %c0_31] : memref<1x128xf32, #tpu.memory_space<vmem>>, vector<1x128xf32>
    %34 = vector.broadcast %33 : vector<1x128xf32> to vector<8x128xf32>
    %35 = arith.addf %32, %34 : vector<8x128xf32>
    %cst_32 = arith.constant 0.000000e+00 : f32
    %36 = vector.broadcast %cst_32 : f32 to vector<8x128xf32>
    %37 = arith.maximumf %35, %36 : vector<8x128xf32>
    %38 = arith.truncf %37 : vector<8x128xf32> to vector<8x128xbf16>
    %c0_33 = arith.constant 0 : index
    %c0_34 = arith.constant 0 : index
    %39 = vector.load %arg15[%c0_33, %c0_34] : memref<128x128xbf16, #tpu.memory_space<vmem>>, vector<128x128xbf16>
    %cst_35 = arith.constant dense<0.000000e+00> : vector<8x128xf32>
    %40 = tpu.matmul %38, %39, %cst_35 {dimension_numbers = #tpu.dot_dimension_numbers<[1], [0], [0], [1], [0, 0, 1, 1], [], []>} : vector<8x128xbf16>, vector<128x128xbf16>, vector<8x128xf32> -> vector<8x128xf32>
    %c0_36 = arith.constant 0 : index
    %c0_37 = arith.constant 0 : index
    %41 = vector.load %arg16[%c0_36, %c0_37] : memref<1x128xf32, #tpu.memory_space<vmem>>, vector<1x128xf32>
    %42 = vector.broadcast %41 : vector<1x128xf32> to vector<8x128xf32>
    %43 = arith.addf %40, %42 : vector<8x128xf32>
    %44 = arith.negf %43 : vector<8x128xf32>
    %45 = math.exp %44 : vector<8x128xf32>
    %cst_38 = arith.constant 1.000000e+00 : f32
    %46 = vector.broadcast %cst_38 : f32 to vector<8x128xf32>
    %47 = arith.addf %46, %45 : vector<8x128xf32>
    %48 = arith.divf %46, %47 : vector<8x128xf32>
    %c0_39 = arith.constant 0 : index
    %49 = memref.load %arg1[%c0_39] : memref<2xf32, #tpu.memory_space<smem>>
    %50 = vector.broadcast %49 : f32 to vector<8x128xf32>
    %51 = arith.mulf %48, %50 : vector<8x128xf32>
    %c1 = arith.constant 1 : index
    %52 = memref.load %arg1[%c1] : memref<2xf32, #tpu.memory_space<smem>>
    %53 = vector.broadcast %52 : f32 to vector<8x128xf32>
    %54 = arith.addf %51, %53 : vector<8x128xf32>
    %c0_40 = arith.constant 0 : index
    %c0_41 = arith.constant 0 : index
    %55 = vector.load %arg17[%c0_40, %c0_41] : memref<8x128xf32, #tpu.memory_space<vmem>>, vector<8x128xf32>
    tpu.vector_store %arg17[%c0_40, %c0_41], %54 {strides = array<i32>} : memref<8x128xf32, #tpu.memory_space<vmem>>, vector<8x128xf32>,
    return
  }
  func.func @transform_0(%arg0: i32) -> i32 {
    %c0_i32 = arith.constant 0 : i32
    %c0_i32_0 = arith.constant 0 : i32
    return %c0_i32 : i32
  }
  func.func @transform_1(%arg0: i32) -> (i32, i32) {
    %c0_i32 = arith.constant 0 : i32
    %c0_i32_0 = arith.constant 0 : i32
    return %arg0, %c0_i32 : i32, i32
  }
  func.func @transform_2(%arg0: i32) -> (i32, i32) {
    %c0_i32 = arith.constant 0 : i32
    %c0_i32_0 = arith.constant 0 : i32
    return %arg0, %c0_i32 : i32, i32
  }
  func.func @transform_3(%arg0: i32) -> (i32, i32) {
    %c0_i32 = arith.constant 0 : i32
    %c0_i32_0 = arith.constant 0 : i32
    return %arg0, %c0_i32 : i32, i32
  }
  func.func @transform_4(%arg0: i32) -> (i32, i32) {
    %c0_i32 = arith.constant 0 : i32
    %c0_i32_0 = arith.constant 0 : i32
    %c0_i32_1 = arith.constant 0 : i32
    return %c0_i32, %c0_i32_0 : i32, i32
  }
  func.func @transform_5(%arg0: i32) -> (i32, i32) {
    %c0_i32 = arith.constant 0 : i32
    %c0_i32_0 = arith.constant 0 : i32
    %c0_i32_1 = arith.constant 0 : i32
    return %c0_i32, %c0_i32_0 : i32, i32
  }
  func.func @transform_6(%arg0: i32) -> (i32, i32) {
    %c0_i32 = arith.constant 0 : i32
    %c0_i32_0 = arith.constant 0 : i32
    %c0_i32_1 = arith.constant 0 : i32
    return %c0_i32, %c0_i32_0 : i32, i32
  }
  func.func @transform_7(%arg0: i32) -> (i32, i32) {
    %c0_i32 = arith.constant 0 : i32
    %c0_i32_0 = arith.constant 0 : i32
    %c0_i32_1 = arith.constant 0 : i32
    return %c0_i32, %c0_i32_0 : i32, i32
  }
  func.func @transform_8(%arg0: i32) -> (i32, i32) {
    %c0_i32 = arith.constant 0 : i32
    %c0_i32_0 = arith.constant 0 : i32
    %c0_i32_1 = arith.constant 0 : i32
    return %c0_i32, %c0_i32_0 : i32, i32
  }
  func.func @transform_9(%arg0: i32) -> (i32, i32) {
    %c0_i32 = arith.constant 0 : i32
    %c0_i32_0 = arith.constant 0 : i32
    %c0_i32_1 = arith.constant 0 : i32
    return %c0_i32, %c0_i32_0 : i32, i32
  }
  func.func @transform_10(%arg0: i32) -> (i32, i32) {
    %c0_i32 = arith.constant 0 : i32
    %c0_i32_0 = arith.constant 0 : i32
    %c0_i32_1 = arith.constant 0 : i32
    return %c0_i32, %c0_i32_0 : i32, i32
  }
  func.func @transform_11(%arg0: i32) -> (i32, i32) {
    %c0_i32 = arith.constant 0 : i32
    %c0_i32_0 = arith.constant 0 : i32
    %c0_i32_1 = arith.constant 0 : i32
    return %c0_i32, %c0_i32_0 : i32, i32
  }
  func.func @transform_12(%arg0: i32) -> (i32, i32) {
    %c0_i32 = arith.constant 0 : i32
    %c0_i32_0 = arith.constant 0 : i32
    %c0_i32_1 = arith.constant 0 : i32
    return %c0_i32, %c0_i32_0 : i32, i32
  }
  func.func @transform_13(%arg0: i32) -> (i32, i32) {
    %c0_i32 = arith.constant 0 : i32
    %c0_i32_0 = arith.constant 0 : i32
    %c0_i32_1 = arith.constant 0 : i32
    return %c0_i32, %c0_i32_0 : i32, i32
  }
  func.func @transform_14(%arg0: i32) -> (i32, i32) {
    %c0_i32 = arith.constant 0 : i32
    %c0_i32_0 = arith.constant 0 : i32
    %c0_i32_1 = arith.constant 0 : i32
    return %c0_i32, %c0_i32_0 : i32, i32
  }
  func.func @transform_15(%arg0: i32) -> (i32, i32) {
    %c0_i32 = arith.constant 0 : i32
    %c0_i32_0 = arith.constant 0 : i32
    %c0_i32_1 = arith.constant 0 : i32
    return %c0_i32, %c0_i32_0 : i32, i32
  }
  func.func @transform_16(%arg0: i32) -> (i32, i32) {
    %c0_i32 = arith.constant 0 : i32
    %c0_i32_0 = arith.constant 0 : i32
    return %arg0, %c0_i32 : i32, i32
  }
}

</mosaic_0001>

<llo_original>
// kernel: tpu_custom_call.1
$region0: #{tpu_custom_call.1}
  #allocation0 [shape = 'u32[]', space=smem, size = 0x4, offset = 0x4, fixed_abs, tag = 'smem constant byte address 0x4 - core index']
  #allocation1 [shape = 'u32[72,128]{1,0:T(1,128)}', space=vmem, size = 0x9000, scoped, tag = 'internal scratch']
  %s0 = inlined_call_operand.hbm [shape: f32[2], index: 0, kind: input, shape index: {}]
  %s1 = inlined_call_operand.hbm [shape: bf16[8,128], index: 1, kind: input, shape index: {}]
  %s2 = inlined_call_operand.hbm [shape: bf16[8,128], index: 2, kind: input, shape index: {}]
  %s3 = inlined_call_operand.hbm [shape: bf16[8,128], index: 3, kind: input, shape index: {}]
  %s4 = inlined_call_operand.hbm [shape: bf16[128,256], index: 4, kind: input, shape index: {}]
  %s5 = inlined_call_operand.vmem [shape: f32[1,256], index: 5, kind: input, shape index: {}]
  %s6 = inlined_call_operand.hbm [shape: bf16[256,128], index: 6, kind: input, shape index: {}]
  %s7 = inlined_call_operand.vmem [shape: f32[1,128], index: 7, kind: input, shape index: {}]
  %s8 = inlined_call_operand.hbm [shape: bf16[128,128], index: 8, kind: input, shape index: {}]
  %s9 = inlined_call_operand.vmem [shape: f32[1,128], index: 9, kind: input, shape index: {}]
  %s10 = inlined_call_operand.hbm [shape: bf16[128,128], index: 10, kind: input, shape index: {}]
  %s11 = inlined_call_operand.hbm [shape: bf16[128,128], index: 11, kind: input, shape index: {}]
  %s12 = inlined_call_operand.hbm [shape: bf16[128,128], index: 12, kind: input, shape index: {}]
  %s13 = inlined_call_operand.vmem [shape: f32[1,128], index: 13, kind: input, shape index: {}]
  %s14 = inlined_call_operand.hbm [shape: bf16[128,128], index: 14, kind: input, shape index: {}]
  %s15 = inlined_call_operand.vmem [shape: f32[1,128], index: 15, kind: input, shape index: {}]
  %s16 = inlined_call_operand.hbm [shape: f32[8,128], index: 16, kind: output, shape index: {}]
  %s17 = sld [smem:[#allocation0]]
  $region118: #{tpu_custom_call.1} parent=0
    _
  %s19 = ssub.s32 1, %s17
  %s20 = scalar_select 0, %s19, %s17
  $region1: #{tpu_custom_call.1} parent=0
    #allocation2 [shape = 'u8[512]{0}', space=smem, size = 0x200, scoped, tag = 'input window, operand 0, single buffered']
    #allocation3 [shape = 's32[1]{0}', space=sflag, size = 0x4, scoped, tag = 'scoped memory for tpu_custom_call.1']
    #allocation4 [shape = 's32[1]{0}', space=sflag, size = 0x4, scoped, tag = 'scoped memory for tpu_custom_call.1']
    #allocation5 [shape = 's32[1]{0}', space=sflag, size = 0x4, scoped, tag = 'scoped memory for tpu_custom_call.1']
    #allocation6 [shape = 'u8[2048]{0}', space=vmem, size = 0x800, scoped, tag = 'input window, operand 1, single buffered']
    #allocation7 [shape = 'u8[2048]{0}', space=vmem, size = 0x800, scoped, tag = 'input window, operand 2, single buffered']
    #allocation8 [shape = 's32[1]{0}', space=sflag, size = 0x4, scoped, tag = 'scoped memory for tpu_custom_call.1']
    #allocation9 [shape = 'u8[2048]{0}', space=vmem, size = 0x800, scoped, tag = 'input window, operand 3, single buffered']
    #allocation10 [shape = 'u8[65536]{0}', space=vmem, size = 0x10000, scoped, tag = 'input window, operand 4, single buffered']
    #allocation11 [shape = 's32[1]{0}', space=sflag, size = 0x4, scoped, tag = 'scoped memory for tpu_custom_call.1']
    #allocation12 [shape = 'u8[65536]{0}', space=vmem, size = 0x10000, scoped, tag = 'input window, operand 6, single buffered']
    #allocation13 [shape = 'u8[32768]{0}', space=vmem, size = 0x8000, scoped, tag = 'input window, operand 8, single buffered']
    #allocation14 [shape = 's32[1]{0}', space=sflag, size = 0x4, scoped, tag = 'scoped memory for tpu_custom_call.1']
    #allocation15 [shape = 'u8[32768]{0}', space=vmem, size = 0x8000, scoped, tag = 'input window, operand 10, single buffered']
    #allocation16 [shape = 'u8[32768]{0}', space=vmem, size = 0x8000, scoped, tag = 'input window, operand 11, single buffered']
    #allocation17 [shape = 's32[1]{0}', space=sflag, size = 0x4, scoped, tag = 'scoped memory for tpu_custom_call.1']
    #allocation18 [shape = 'u8[32768]{0}', space=vmem, size = 0x8000, scoped, tag = 'input window, operand 12, single buffered']
    #allocation19 [shape = 'u8[32768]{0}', space=vmem, size = 0x8000, scoped, tag = 'input window, operand 14, single buffered']
    #allocation20 [shape = 's32[1]{0}', space=sflag, size = 0x4, scoped, tag = 'scoped memory for tpu_custom_call.1']
    #allocation21 [shape = 'u8[4096]{0}', space=vmem, size = 0x1000, scoped, tag = 'output window, operand 0, single buffered']
    %21 = vsyncpa [#allocation5], 0
    %22 = vsyncpa [#allocation3], 0
    %23 = vsyncpa [#allocation8], 0
    %24 = vsyncpa [#allocation11], 0
    %25 = vsyncpa [#allocation14], 0
    %26 = vsyncpa [#allocation17], 0
    %27 = vsyncpa [#allocation20], 0
    %28 = vsyncpa [#allocation4], 0
    // Predicated region
    $region2: #{tpu_custom_call.1} parent=1 // pred_check
      _
    $region3: #{tpu_custom_call.1} parent=1 // pred_check_branch
      %30 = sbr.rel (0) target = $region5
    $region4: #{tpu_custom_call.1} parent=1 // pred_region
      %32 = vsyncadd [#allocation5], 0
      %s34 = sshll.u32 %s0, 4
      %s35 = int_to_ptr.hbm [resolvable:$true] %s34
      %37 = dma.hbm_to_smem %s35, 16, [#allocation2], [#allocation5]
    $region5: #{tpu_custom_call.1} parent=1 // pred_fallthru
      _
    // Predicated region
    $region6: #{tpu_custom_call.1} parent=1 // pred_check
      _
    $region7: #{tpu_custom_call.1} parent=1 // pred_check_branch
      %39 = sbr.rel (0) target = $region9
    $region8: #{tpu_custom_call.1} parent=1 // pred_region
      %41 = vsyncadd [#allocation3], 0
      %s43 = sshll.u32 %s1, 4
      %s44 = int_to_ptr.hbm [resolvable:$true] %s43
      %s45 = sshll.u32 [#allocation6], 4
      %s46 = int_to_ptr.vmem [resolvable:$true] %s45
      %48 = dma.hbm_to_vmem [thread:$0]  %s44, 64, %s46, [#allocation3]
    $region9: #{tpu_custom_call.1} parent=1 // pred_fallthru
      _
    // Predicated region
    $region10: #{tpu_custom_call.1} parent=1 // pred_check
      _
    $region11: #{tpu_custom_call.1} parent=1 // pred_check_branch
      %50 = sbr.rel (0) target = $region13
    $region12: #{tpu_custom_call.1} parent=1 // pred_region
      %52 = vsyncadd [#allocation8], 0
      %s54 = sshll.u32 %s2, 4
      %s55 = int_to_ptr.hbm [resolvable:$true] %s54
      %s56 = sshll.u32 [#allocation7], 4
      %s57 = int_to_ptr.vmem [resolvable:$true] %s56
      %59 = dma.hbm_to_vmem [thread:$0]  %s55, 64, %s57, [#allocation8]
    $region13: #{tpu_custom_call.1} parent=1 // pred_fallthru
      _
    // Predicated region
    $region14: #{tpu_custom_call.1} parent=1 // pred_check
      _
    $region15: #{tpu_custom_call.1} parent=1 // pred_check_branch
      %61 = sbr.rel (0) target = $region17
    $region16: #{tpu_custom_call.1} parent=1 // pred_region
      %63 = vsyncadd [#allocation8], 0
      %s65 = sshll.u32 %s3, 4
      %s66 = int_to_ptr.hbm [resolvable:$true] %s65
      %s67 = sshll.u32 [#allocation9], 4
      %s68 = int_to_ptr.vmem [resolvable:$true] %s67
      %70 = dma.hbm_to_vmem [thread:$0]  %s66, 64, %s68, [#allocation8]
    $region17: #{tpu_custom_call.1} parent=1 // pred_fallthru
      _
    // Predicated region
    $region18: #{tpu_custom_call.1} parent=1 // pred_check
      _
    $region19: #{tpu_custom_call.1} parent=1 // pred_check_branch
      %72 = sbr.rel (0) target = $region21
    $region20: #{tpu_custom_call.1} parent=1 // pred_region
      %74 = vsyncadd [#allocation11], 0
      %s75 = sshll.u32 %s4, 4
      %s76 = int_to_ptr.hbm [resolvable:$true] %s75
      %s77 = sshll.u32 [#allocation10], 4
      %s78 = int_to_ptr.vmem [resolvable:$true] %s77
      %83 = dma.hbm_to_vmem [thread:$0]  %s76, 2048, %s78, [#allocation11], 128, 128, 8
    $region21: #{tpu_custom_call.1} parent=1 // pred_fallthru
      _
    // Predicated region
    $region22: #{tpu_custom_call.1} parent=1 // pred_check
      _
    $region23: #{tpu_custom_call.1} parent=1 // pred_check_branch
      %85 = sbr.rel (0) target = $region25
    $region24: #{tpu_custom_call.1} parent=1 // pred_region
      _
    $region25: #{tpu_custom_call.1} parent=1 // pred_fallthru
      _
    // Predicated region
    $region26: #{tpu_custom_call.1} parent=1 // pred_check
      _
    $region27: #{tpu_custom_call.1} parent=1 // pred_check_branch
      %87 = sbr.rel (0) target = $region29
    $region28: #{tpu_custom_call.1} parent=1 // pred_region
      %89 = vsyncadd [#allocation11], 0
      %s90 = sshll.u32 %s6, 4
      %s91 = int_to_ptr.hbm [resolvable:$true] %s90
      %s92 = sshll.u32 [#allocation12], 4
      %s93 = int_to_ptr.vmem [resolvable:$true] %s92
      %98 = dma.hbm_to_vmem [thread:$0]  %s91, 2048, %s93, [#allocation11], 64, 64, 4
    $region29: #{tpu_custom_call.1} parent=1 // pred_fallthru
      _
    // Predicated region
    $region30: #{tpu_custom_call.1} parent=1 // pred_check
      _
    $region31: #{tpu_custom_call.1} parent=1 // pred_check_branch
      %100 = sbr.rel (0) target = $region33
    $region32: #{tpu_custom_call.1} parent=1 // pred_region
      _
    $region33: #{tpu_custom_call.1} parent=1 // pred_fallthru
      _
    // Predicated region
    $region34: #{tpu_custom_call.1} parent=1 // pred_check
      _
    $region35: #{tpu_custom_call.1} parent=1 // pred_check_branch
      %102 = sbr.rel (0) target = $region37
    $region36: #{tpu_custom_call.1} parent=1 // pred_region
      %104 = vsyncadd [#allocation14], 0
      %s105 = sshll.u32 %s8, 4
      %s106 = int_to_ptr.hbm [resolvable:$true] %s105
      %s107 = sshll.u32 [#allocation13], 4
      %s108 = int_to_ptr.vmem [resolvable:$true] %s107
      %113 = dma.hbm_to_vmem [thread:$0]  %s106, 1024, %s108, [#allocation14], 64, 64, 4
    $region37: #{tpu_custom_call.1} parent=1 // pred_fallthru
      _
    // Predicated region
    $region38: #{tpu_custom_call.1} parent=1 // pred_check
      _
    $region39: #{tpu_custom_call.1} parent=1 // pred_check_branch
      %115 = sbr.rel (0) target = $region41
    $region40: #{tpu_custom_call.1} parent=1 // pred_region
      _
    $region41: #{tpu_custom_call.1} parent=1 // pred_fallthru
      _
    // Predicated region
    $region42: #{tpu_custom_call.1} parent=1 // pred_check
      _
    $region43: #{tpu_custom_call.1} parent=1 // pred_check_branch
      %117 = sbr.rel (0) target = $region45
    $region44: #{tpu_custom_call.1} parent=1 // pred_region
      %119 = vsyncadd [#allocation14], 0
      %s120 = sshll.u32 %s10, 4
      %s121 = int_to_ptr.hbm [resolvable:$true] %s120
      %s122 = sshll.u32 [#allocation15], 4
      %s123 = int_to_ptr.vmem [resolvable:$true] %s122
      %128 = dma.hbm_to_vmem [thread:$0]  %s121, 1024, %s123, [#allocation14], 64, 64, 4
    $region45: #{tpu_custom_call.1} parent=1 // pred_fallthru
      _
    // Predicated region
    $region46: #{tpu_custom_call.1} parent=1 // pred_check
      _
    $region47: #{tpu_custom_call.1} parent=1 // pred_check_branch
      %130 = sbr.rel (0) target = $region49
    $region48: #{tpu_custom_call.1} parent=1 // pred_region
      %132 = vsyncadd [#allocation17], 0
      %s133 = sshll.u32 %s11, 4
      %s134 = int_to_ptr.hbm [resolvable:$true] %s133
      %s135 = sshll.u32 [#allocation16], 4
      %s136 = int_to_ptr.vmem [resolvable:$true] %s135
      %141 = dma.hbm_to_vmem [thread:$0]  %s134, 1024, %s136, [#allocation17], 64, 64, 4
    $region49: #{tpu_custom_call.1} parent=1 // pred_fallthru
      _
    // Predicated region
    $region50: #{tpu_custom_call.1} parent=1 // pred_check
      _
    $region51: #{tpu_custom_call.1} parent=1 // pred_check_branch
      %143 = sbr.rel (0) target = $region53
    $region52: #{tpu_custom_call.1} parent=1 // pred_region
      %145 = vsyncadd [#allocation17], 0
      %s146 = sshll.u32 %s12, 4
      %s147 = int_to_ptr.hbm [resolvable:$true] %s146
      %s148 = sshll.u32 [#allocation18], 4
      %s149 = int_to_ptr.vmem [resolvable:$true] %s148
      %154 = dma.hbm_to_vmem [thread:$0]  %s147, 1024, %s149, [#allocation17], 64, 64, 4
    $region53: #{tpu_custom_call.1} parent=1 // pred_fallthru
      _
    // Predicated region
    $region54: #{tpu_custom_call.1} parent=1 // pred_check
      _
    $region55: #{tpu_custom_call.1} parent=1 // pred_check_branch
      %156 = sbr.rel (0) target = $region57
    $region56: #{tpu_custom_call.1} parent=1 // pred_region
      _
    $region57: #{tpu_custom_call.1} parent=1 // pred_fallthru
      _
    // Predicated region
    $region58: #{tpu_custom_call.1} parent=1 // pred_check
      _
    $region59: #{tpu_custom_call.1} parent=1 // pred_check_branch
      %158 = sbr.rel (0) target = $region61
    $region60: #{tpu_custom_call.1} parent=1 // pred_region
      %160 = vsyncadd [#allocation20], 0
      %s161 = sshll.u32 %s14, 4
      %s162 = int_to_ptr.hbm [resolvable:$true] %s161
      %s163 = sshll.u32 [#allocation19], 4
      %s164 = int_to_ptr.vmem [resolvable:$true] %s163
      %169 = dma.hbm_to_vmem [thread:$0]  %s162, 1024, %s164, [#allocation20], 64, 64, 4
    $region61: #{tpu_custom_call.1} parent=1 // pred_fallthru
      _
    // Predicated region
    $region62: #{tpu_custom_call.1} parent=1 // pred_check
      _
    $region63: #{tpu_custom_call.1} parent=1 // pred_check_branch
      %171 = sbr.rel (0) target = $region65
    $region64: #{tpu_custom_call.1} parent=1 // pred_region
      _
    $region65: #{tpu_custom_call.1} parent=1 // pred_fallthru
      _
    // Predicated region
    $region66: #{tpu_custom_call.1} parent=1 // pred_check
      _
    $region67: #{tpu_custom_call.1} parent=1 // pred_check_branch
      %173 = sbr.rel (0) target = $region69
    $region68: #{tpu_custom_call.1} parent=1 // pred_region
      %175 = dma.done [#allocation5], 16
    $region69: #{tpu_custom_call.1} parent=1 // pred_fallthru
      _
    // Predicated region
    $region70: #{tpu_custom_call.1} parent=1 // pred_check
      _
    $region71: #{tpu_custom_call.1} parent=1 // pred_check_branch
      %177 = sbr.rel (0) target = $region73
    $region72: #{tpu_custom_call.1} parent=1 // pred_region
      %179 = dma.done [#allocation3], 64
    $region73: #{tpu_custom_call.1} parent=1 // pred_fallthru
      _
    // Predicated region
    $region74: #{tpu_custom_call.1} parent=1 // pred_check
      _
    $region75: #{tpu_custom_call.1} parent=1 // pred_check_branch
      %181 = sbr.rel (0) target = $region77
    $region76: #{tpu_custom_call.1} parent=1 // pred_region
      %183 = dma.done [#allocation8], 64
    $region77: #{tpu_custom_call.1} parent=1 // pred_fallthru
      _
    // Predicated region
    $region78: #{tpu_custom_call.1} parent=1 // pred_check
      _
    $region79: #{tpu_custom_call.1} parent=1 // pred_check_branch
      %185 = sbr.rel (0) target = $region81
    $region80: #{tpu_custom_call.1} parent=1 // pred_region
      %187 = dma.done [#allocation8], 64
    $region81: #{tpu_custom_call.1} parent=1 // pred_fallthru
      _
    // Predicated region
    $region82: #{tpu_custom_call.1} parent=1 // pred_check
      _
    $region83: #{tpu_custom_call.1} parent=1 // pred_check_branch
      %189 = sbr.rel (0) target = $region85
    $region84: #{tpu_custom_call.1} parent=1 // pred_region
      %191 = dma.done [#allocation11], 2048
    $region85: #{tpu_custom_call.1} parent=1 // pred_fallthru
      _
    // Predicated region
    $region86: #{tpu_custom_call.1} parent=1 // pred_check
      _
    $region87: #{tpu_custom_call.1} parent=1 // pred_check_branch
      %193 = sbr.rel (0) target = $region89
    $region88: #{tpu_custom_call.1} parent=1 // pred_region
      %195 = dma.done [#allocation11], 2048
    $region89: #{tpu_custom_call.1} parent=1 // pred_fallthru
      _
    // Predicated region
    $region90: #{tpu_custom_call.1} parent=1 // pred_check
      _
    $region91: #{tpu_custom_call.1} parent=1 // pred_check_branch
      %197 = sbr.rel (0) target = $region93
    $region92: #{tpu_custom_call.1} parent=1 // pred_region
      %199 = dma.done [#allocation14], 1024
    $region93: #{tpu_custom_call.1} parent=1 // pred_fallthru
      _
    // Predicated region
    $region94: #{tpu_custom_call.1} parent=1 // pred_check
      _
    $region95: #{tpu_custom_call.1} parent=1 // pred_check_branch
      %201 = sbr.rel (0) target = $region97
    $region96: #{tpu_custom_call.1} parent=1 // pred_region
      %203 = dma.done [#allocation14], 1024
    $region97: #{tpu_custom_call.1} parent=1 // pred_fallthru
      _
    // Predicated region
    $region98: #{tpu_custom_call.1} parent=1 // pred_check
      _
    $region99: #{tpu_custom_call.1} parent=1 // pred_check_branch
      %205 = sbr.rel (0) target = $region101
    $region100: #{tpu_custom_call.1} parent=1 // pred_region
      %207 = dma.done [#allocation17], 1024
    $region101: #{tpu_custom_call.1} parent=1 // pred_fallthru
      _
    // Predicated region
    $region102: #{tpu_custom_call.1} parent=1 // pred_check
      _
    $region103: #{tpu_custom_call.1} parent=1 // pred_check_branch
      %209 = sbr.rel (0) target = $region105
    $region104: #{tpu_custom_call.1} parent=1 // pred_region
      %211 = dma.done [#allocation17], 1024
    $region105: #{tpu_custom_call.1} parent=1 // pred_fallthru
      _
    // Predicated region
    $region106: #{tpu_custom_call.1} parent=1 // pred_check
      _
    $region107: #{tpu_custom_call.1} parent=1 // pred_check_branch
      %213 = sbr.rel (0) target = $region109
    $region108: #{tpu_custom_call.1} parent=1 // pred_region
      %215 = dma.done [#allocation20], 1024
    $region109: #{tpu_custom_call.1} parent=1 // pred_fallthru
      _
    %216 = sfence
    %v217 = vld [vmem:[#allocation6] sm:$0xf]
    %v218 = vld [vmem:[#allocation10] sm:$0xff]
    %v219 = vld [vmem:[#allocation10 + $0x8] sm:$0xff]
    %v220 = vld [vmem:[#allocation10 + $0x10] sm:$0xff]
    %v221 = vld [vmem:[#allocation10 + $0x18] sm:$0xff]
    %v222 = vld [vmem:[#allocation10 + $0x20] sm:$0xff]
    %v223 = vld [vmem:[#allocation10 + $0x28] sm:$0xff]
    %v224 = vld [vmem:[#allocation10 + $0x30] sm:$0xff]
    %v225 = vld [vmem:[#allocation10 + $0x38] sm:$0xff]
    %v226 = vld [vmem:[#allocation10 + $0x40] sm:$0xff]
    %v227 = vld [vmem:[#allocation10 + $0x48] sm:$0xff]
    %v228 = vld [vmem:[#allocation10 + $0x50] sm:$0xff]
    %v229 = vld [vmem:[#allocation10 + $0x58] sm:$0xff]
    %v230 = vld [vmem:[#allocation10 + $0x60] sm:$0xff]
    %v231 = vld [vmem:[#allocation10 + $0x68] sm:$0xff]
    %v232 = vld [vmem:[#allocation10 + $0x70] sm:$0xff]
    %v233 = vld [vmem:[#allocation10 + $0x78] sm:$0xff]
    %v234 = vld [vmem:[%s5] sm:$0x3]
    %v236 = vperm.slane %v234, 0
    %v237 = vperm.slane %v234, 1
    %v256 = vunpack.c.l.b16 %v218
    %v257 = vunpack.c.h.b16 %v218
    %v258 = vunpack.c.l.b16 %v219
    %v259 = vunpack.c.h.b16 %v219
    %v260 = vunpack.c.l.b16 %v220
    %v261 = vunpack.c.h.b16 %v220
    %v262 = vunpack.c.l.b16 %v221
    %v263 = vunpack.c.h.b16 %v221
    %v264 = vunpack.c.l.b16 %v222
    %v265 = vunpack.c.h.b16 %v222
    %v266 = vunpack.c.l.b16 %v223
    %v267 = vunpack.c.h.b16 %v223
    %v268 = vunpack.c.l.b16 %v224
    %v269 = vunpack.c.h.b16 %v224
    %v270 = vunpack.c.l.b16 %v225
    %v271 = vunpack.c.h.b16 %v225
    %v272 = vunpack.c.l.b16 %v226
    %v273 = vunpack.c.h.b16 %v226
    %v274 = vunpack.c.l.b16 %v227
    %v275 = vunpack.c.h.b16 %v227
    %v276 = vunpack.c.l.b16 %v228
    %v277 = vunpack.c.h.b16 %v228
    %v278 = vunpack.c.l.b16 %v229
    %v279 = vunpack.c.h.b16 %v229
    %v280 = vunpack.c.l.b16 %v230
    %v281 = vunpack.c.h.b16 %v230
    %v282 = vunpack.c.l.b16 %v231
    %v283 = vunpack.c.h.b16 %v231
    %v284 = vunpack.c.l.b16 %v232
    %v285 = vunpack.c.h.b16 %v232
    %v286 = vunpack.c.l.b16 %v233
    %v287 = vunpack.c.h.b16 %v233
    %v288 = vpack.c.b16 %v258, %v256
    %v289 = vpack.c.b16 %v259, %v257
    %v290 = vpack.c.b16 %v262, %v260
    %v291 = vpack.c.b16 %v263, %v261
    %v292 = vpack.c.b16 %v266, %v264
    %v293 = vpack.c.b16 %v267, %v265
    %v294 = vpack.c.b16 %v270, %v268
    %v295 = vpack.c.b16 %v271, %v269
    %v296 = vpack.c.b16 %v274, %v272
    %v297 = vpack.c.b16 %v275, %v273
    %v298 = vpack.c.b16 %v278, %v276
    %v299 = vpack.c.b16 %v279, %v277
    %v300 = vpack.c.b16 %v282, %v280
    %v301 = vpack.c.b16 %v283, %v281
    %v302 = vpack.c.b16 %v286, %v284
    %v303 = vpack.c.b16 %v287, %v285
    %320 = vmatpush.bf16.msra.mxu0 %v302
    %321 = vmatpush.bf16.msra.mxu0 %v300
    %322 = vmatpush.bf16.msra.mxu0 %v298
    %323 = vmatpush.bf16.msra.mxu0 %v296
    %324 = vmatpush.bf16.msra.mxu0 %v294
    %325 = vmatpush.bf16.msra.mxu0 %v292
    %326 = vmatpush.bf16.msra.mxu0 %v290
    %327 = vmatpush.bf16.msra.mxu0 %v288
    %328 = vmatmul.bf16.gmra.mxu0 %v217
    %v329 = vpop.f32.mrf.mxu0
    %v330 = vadd.f32 %v236, %v329
    %v331 = vpop.f32.mrf.mxu0
    %332 = vdwg.mxu0
    %333 = vmatpush.bf16.msra.mxu0 %v303
    %334 = vmatpush.bf16.msra.mxu0 %v301
    %335 = vmatpush.bf16.msra.mxu0 %v299
    %336 = vmatpush.bf16.msra.mxu0 %v297
    %337 = vmatpush.bf16.msra.mxu0 %v295
    %338 = vmatpush.bf16.msra.mxu0 %v293
    %339 = vmatpush.bf16.msra.mxu0 %v291
    %340 = vmatpush.bf16.msra.mxu0 %v289
    %341 = vmatmul.bf16.gmra.mxu0 %v217
    %v342 = vpop.f32.mrf.mxu0
    %v343 = vadd.f32 %v237, %v342
    %v344 = vpop.f32.mrf.mxu0
    %345 = vdwg.mxu0
    %v346 = vmax.f32 %v330, 0.0
    %v347 = vmax.f32 %v343, 0.0
    %v348 = vpack.c.bf16 %v346, %v346
    %v349 = vpack.c.bf16 %v347, %v347
    %v350 = vld [vmem:[#allocation12] sm:$0xf]
    %v351 = vld [vmem:[#allocation12 + $0x4] sm:$0xf]
    %v352 = vld [vmem:[#allocation12 + $0x8] sm:$0xf]
    %v353 = vld [vmem:[#allocation12 + $0xc] sm:$0xf]
    %v354 = vld [vmem:[#allocation12 + $0x10] sm:$0xf]
    %v355 = vld [vmem:[#allocation12 + $0x14] sm:$0xf]
    %v356 = vld [vmem:[#allocation12 + $0x18] sm:$0xf]
    %v357 = vld [vmem:[#allocation12 + $0x1c] sm:$0xf]
    %v358 = vld [vmem:[#allocation12 + $0x20] sm:$0xf]
    %v359 = vld [vmem:[#allocation12 + $0x24] sm:$0xf]
    %v360 = vld [vmem:[#allocation12 + $0x28] sm:$0xf]
    %v361 = vld [vmem:[#allocation12 + $0x2c] sm:$0xf]
    %v362 = vld [vmem:[#allocation12 + $0x30] sm:$0xf]
    %v363 = vld [vmem:[#allocation12 + $0x34] sm:$0xf]
    %v364 = vld [vmem:[#allocation12 + $0x38] sm:$0xf]
    %v365 = vld [vmem:[#allocation12 + $0x3c] sm:$0xf]
    %v366 = vld [vmem:[#allocation12 + $0x40] sm:$0xf]
    %v367 = vld [vmem:[#allocation12 + $0x44] sm:$0xf]
    %v368 = vld [vmem:[#allocation12 + $0x48] sm:$0xf]
    %v369 = vld [vmem:[#allocation12 + $0x4c] sm:$0xf]
    %v370 = vld [vmem:[#allocation12 + $0x50] sm:$0xf]
    %v371 = vld [vmem:[#allocation12 + $0x54] sm:$0xf]
    %v372 = vld [vmem:[#allocation12 + $0x58] sm:$0xf]
    %v373 = vld [vmem:[#allocation12 + $0x5c] sm:$0xf]
    %v374 = vld [vmem:[#allocation12 + $0x60] sm:$0xf]
    %v375 = vld [vmem:[#allocation12 + $0x64] sm:$0xf]
    %v376 = vld [vmem:[#allocation12 + $0x68] sm:$0xf]
    %v377 = vld [vmem:[#allocation12 + $0x6c] sm:$0xf]
    %v378 = vld [vmem:[#allocation12 + $0x70] sm:$0xf]
    %v379 = vld [vmem:[#allocation12 + $0x74] sm:$0xf]
    %v380 = vld [vmem:[#allocation12 + $0x78] sm:$0xf]
    %v381 = vld [vmem:[#allocation12 + $0x7c] sm:$0xf]
    %v382 = vld [vmem:[%s7] sm:$0x1]
    %v384 = vperm.slane %v382, 0
    %v418 = vunpack.c.l.b16 %v350
    %v419 = vunpack.c.l.b16 %v351
    %v420 = vunpack.c.l.b16 %v352
    %v421 = vunpack.c.l.b16 %v353
    %v422 = vunpack.c.l.b16 %v354
    %v423 = vunpack.c.l.b16 %v355
    %v424 = vunpack.c.l.b16 %v356
    %v425 = vunpack.c.l.b16 %v357
    %v426 = vunpack.c.l.b16 %v358
    %v427 = vunpack.c.l.b16 %v359
    %v428 = vunpack.c.l.b16 %v360
    %v429 = vunpack.c.l.b16 %v361
    %v430 = vunpack.c.l.b16 %v362
    %v431 = vunpack.c.l.b16 %v363
    %v432 = vunpack.c.l.b16 %v364
    %v433 = vunpack.c.l.b16 %v365
    %v434 = vunpack.c.l.b16 %v366
    %v435 = vunpack.c.l.b16 %v367
    %v436 = vunpack.c.l.b16 %v368
    %v437 = vunpack.c.l.b16 %v369
    %v438 = vunpack.c.l.b16 %v370
    %v439 = vunpack.c.l.b16 %v371
    %v440 = vunpack.c.l.b16 %v372
    %v441 = vunpack.c.l.b16 %v373
    %v442 = vunpack.c.l.b16 %v374
    %v443 = vunpack.c.l.b16 %v375
    %v444 = vunpack.c.l.b16 %v376
    %v445 = vunpack.c.l.b16 %v377
    %v446 = vunpack.c.l.b16 %v378
    %v447 = vunpack.c.l.b16 %v379
    %v448 = vunpack.c.l.b16 %v380
    %v449 = vunpack.c.l.b16 %v381
    %v450 = vpack.c.b16 %v419, %v418
    %v451 = vpack.c.b16 %v421, %v420
    %v452 = vpack.c.b16 %v423, %v422
    %v453 = vpack.c.b16 %v425, %v424
    %v454 = vpack.c.b16 %v427, %v426
    %v455 = vpack.c.b16 %v429, %v428
    %v456 = vpack.c.b16 %v431, %v430
    %v457 = vpack.c.b16 %v433, %v432
    %v458 = vpack.c.b16 %v435, %v434
    %v459 = vpack.c.b16 %v437, %v436
    %v460 = vpack.c.b16 %v439, %v438
    %v461 = vpack.c.b16 %v441, %v440
    %v462 = vpack.c.b16 %v443, %v442
    %v463 = vpack.c.b16 %v445, %v444
    %v464 = vpack.c.b16 %v447, %v446
    %v465 = vpack.c.b16 %v449, %v448
    %482 = vmatpush.bf16.msra.mxu0 %v457
    %483 = vmatpush.bf16.msra.mxu0 %v456
    %484 = vmatpush.bf16.msra.mxu0 %v455
    %485 = vmatpush.bf16.msra.mxu0 %v454
    %486 = vmatpush.bf16.msra.mxu0 %v453
    %487 = vmatpush.bf16.msra.mxu0 %v452
    %488 = vmatpush.bf16.msra.mxu0 %v451
    %489 = vmatpush.bf16.msra.mxu0 %v450
    %490 = vmatmul.bf16.gmra.mxu0 %v348
    %v491 = vpop.f32.mrf.mxu0
    %v492 = vadd.f32 %v384, %v491
    %v493 = vpop.f32.mrf.mxu0
    %494 = vdwg.mxu0
    %495 = vmatpush.bf16.msra.mxu0 %v465
    %496 = vmatpush.bf16.msra.mxu0 %v464
    %497 = vmatpush.bf16.msra.mxu0 %v463
    %498 = vmatpush.bf16.msra.mxu0 %v462
    %499 = vmatpush.bf16.msra.mxu0 %v461
    %500 = vmatpush.bf16.msra.mxu0 %v460
    %501 = vmatpush.bf16.msra.mxu0 %v459
    %502 = vmatpush.bf16.msra.mxu0 %v458
    %503 = vmatmul.bf16.gmra.mxu0 %v349
    %v504 = vpop.f32.mrf.mxu0
    %v505 = vadd.f32 %v492, %v504
    %v506 = vpop.f32.mrf.mxu0
    %507 = vdwg.mxu0
    %v508 = vmax.f32 %v505, 0.0
    %v509 = vpack.c.bf16 %v508, %v508
    %v510 = vld [vmem:[#allocation13] sm:$0xf]
    %v511 = vld [vmem:[#allocation13 + $0x4] sm:$0xf]
    %v512 = vld [vmem:[#allocation13 + $0x8] sm:$0xf]
    %v513 = vld [vmem:[#allocation13 + $0xc] sm:$0xf]
    %v514 = vld [vmem:[#allocation13 + $0x10] sm:$0xf]
    %v515 = vld [vmem:[#allocation13 + $0x14] sm:$0xf]
    %v516 = vld [vmem:[#allocation13 + $0x18] sm:$0xf]
    %v517 = vld [vmem:[#allocation13 + $0x1c] sm:$0xf]
    %v518 = vld [vmem:[#allocation13 + $0x20] sm:$0xf]
    %v519 = vld [vmem:[#allocation13 + $0x24] sm:$0xf]
    %v520 = vld [vmem:[#allocation13 + $0x28] sm:$0xf]
    %v521 = vld [vmem:[#allocation13 + $0x2c] sm:$0xf]
    %v522 = vld [vmem:[#allocation13 + $0x30] sm:$0xf]
    %v523 = vld [vmem:[#allocation13 + $0x34] sm:$0xf]
    %v524 = vld [vmem:[#allocation13 + $0x38] sm:$0xf]
    %v525 = vld [vmem:[#allocation13 + $0x3c] sm:$0xf]
    %v526 = vld [vmem:[%s9] sm:$0x1]
    %v528 = vperm.slane %v526, 0
    %v546 = vunpack.c.l.b16 %v510
    %v547 = vunpack.c.l.b16 %v511
    %v548 = vunpack.c.l.b16 %v512
    %v549 = vunpack.c.l.b16 %v513
    %v550 = vunpack.c.l.b16 %v514
    %v551 = vunpack.c.l.b16 %v515
    %v552 = vunpack.c.l.b16 %v516
    %v553 = vunpack.c.l.b16 %v517
    %v554 = vunpack.c.l.b16 %v518
    %v555 = vunpack.c.l.b16 %v519
    %v556 = vunpack.c.l.b16 %v520
    %v557 = vunpack.c.l.b16 %v521
    %v558 = vunpack.c.l.b16 %v522
    %v559 = vunpack.c.l.b16 %v523
    %v560 = vunpack.c.l.b16 %v524
    %v561 = vunpack.c.l.b16 %v525
    %v562 = vpack.c.b16 %v547, %v546
    %v563 = vpack.c.b16 %v549, %v548
    %v564 = vpack.c.b16 %v551, %v550
    %v565 = vpack.c.b16 %v553, %v552
    %v566 = vpack.c.b16 %v555, %v554
    %v567 = vpack.c.b16 %v557, %v556
    %v568 = vpack.c.b16 %v559, %v558
    %v569 = vpack.c.b16 %v561, %v560
    %578 = vmatpush.bf16.msra.mxu0 %v569
    %579 = vmatpush.bf16.msra.mxu0 %v568
    %580 = vmatpush.bf16.msra.mxu0 %v567
    %581 = vmatpush.bf16.msra.mxu0 %v566
    %582 = vmatpush.bf16.msra.mxu0 %v565
    %583 = vmatpush.bf16.msra.mxu0 %v564
    %584 = vmatpush.bf16.msra.mxu0 %v563
    %585 = vmatpush.bf16.msra.mxu0 %v562
    %586 = vmatmul.bf16.gmra.mxu0 %v509
    %v587 = vpop.f32.mrf.mxu0
    %v588 = vadd.f32 %v528, %v587
    %v589 = vpop.f32.mrf.mxu0
    %590 = vdwg.mxu0
    %v591 = vpack.c.bf16 %v588, %v588
    %v592 = vld [vmem:[#allocation15] sm:$0xf]
    %v593 = vld [vmem:[#allocation15 + $0x4] sm:$0xf]
    %v594 = vld [vmem:[#allocation15 + $0x8] sm:$0xf]
    %v595 = vld [vmem:[#allocation15 + $0xc] sm:$0xf]
    %v596 = vld [vmem:[#allocation15 + $0x10] sm:$0xf]
    %v597 = vld [vmem:[#allocation15 + $0x14] sm:$0xf]
    %v598 = vld [vmem:[#allocation15 + $0x18] sm:$0xf]
    %v599 = vld [vmem:[#allocation15 + $0x1c] sm:$0xf]
    %v600 = vld [vmem:[#allocation15 + $0x20] sm:$0xf]
    %v601 = vld [vmem:[#allocation15 + $0x24] sm:$0xf]
    %v602 = vld [vmem:[#allocation15 + $0x28] sm:$0xf]
    %v603 = vld [vmem:[#allocation15 + $0x2c] sm:$0xf]
    %v604 = vld [vmem:[#allocation15 + $0x30] sm:$0xf]
    %v605 = vld [vmem:[#allocation15 + $0x34] sm:$0xf]
    %v606 = vld [vmem:[#allocation15 + $0x38] sm:$0xf]
    %v607 = vld [vmem:[#allocation15 + $0x3c] sm:$0xf]
    %v608 = vld [vmem:[#allocation7] sm:$0xf]
    %v609 = vld [vmem:[#allocation16] sm:$0xf]
    %v610 = vld [vmem:[#allocation16 + $0x4] sm:$0xf]
    %v611 = vld [vmem:[#allocation16 + $0x8] sm:$0xf]
    %v612 = vld [vmem:[#allocation16 + $0xc] sm:$0xf]
    %v613 = vld [vmem:[#allocation16 + $0x10] sm:$0xf]
    %v614 = vld [vmem:[#allocation16 + $0x14] sm:$0xf]
    %v615 = vld [vmem:[#allocation16 + $0x18] sm:$0xf]
    %v616 = vld [vmem:[#allocation16 + $0x1c] sm:$0xf]
    %v617 = vld [vmem:[#allocation16 + $0x20] sm:$0xf]
    %v618 = vld [vmem:[#allocation16 + $0x24] sm:$0xf]
    %v619 = vld [vmem:[#allocation16 + $0x28] sm:$0xf]
    %v620 = vld [vmem:[#allocation16 + $0x2c] sm:$0xf]
    %v621 = vld [vmem:[#allocation16 + $0x30] sm:$0xf]
    %v622 = vld [vmem:[#allocation16 + $0x34] sm:$0xf]
    %v623 = vld [vmem:[#allocation16 + $0x38] sm:$0xf]
    %v624 = vld [vmem:[#allocation16 + $0x3c] sm:$0xf]
    %v641 = vunpack.c.l.b16 %v609
    %v642 = vunpack.c.l.b16 %v610
    %v643 = vunpack.c.l.b16 %v611
    %v644 = vunpack.c.l.b16 %v612
    %v645 = vunpack.c.l.b16 %v613
    %v646 = vunpack.c.l.b16 %v614
    %v647 = vunpack.c.l.b16 %v615
    %v648 = vunpack.c.l.b16 %v616
    %v649 = vunpack.c.l.b16 %v617
    %v650 = vunpack.c.l.b16 %v618
    %v651 = vunpack.c.l.b16 %v619
    %v652 = vunpack.c.l.b16 %v620
    %v653 = vunpack.c.l.b16 %v621
    %v654 = vunpack.c.l.b16 %v622
    %v655 = vunpack.c.l.b16 %v623
    %v656 = vunpack.c.l.b16 %v624
    %v657 = vpack.c.b16 %v642, %v641
    %v658 = vpack.c.b16 %v644, %v643
    %v659 = vpack.c.b16 %v646, %v645
    %v660 = vpack.c.b16 %v648, %v647
    %v661 = vpack.c.b16 %v650, %v649
    %v662 = vpack.c.b16 %v652, %v651
    %v663 = vpack.c.b16 %v654, %v653
    %v664 = vpack.c.b16 %v656, %v655
    %673 = vmatpush.bf16.msra.mxu0 %v664
    %674 = vmatpush.bf16.msra.mxu0 %v663
    %675 = vmatpush.bf16.msra.mxu0 %v662
    %676 = vmatpush.bf16.msra.mxu0 %v661
    %677 = vmatpush.bf16.msra.mxu0 %v660
    %678 = vmatpush.bf16.msra.mxu0 %v659
    %679 = vmatpush.bf16.msra.mxu0 %v658
    %680 = vmatpush.bf16.msra.mxu0 %v657
    %681 = vmatmul.bf16.gmra.mxu0 %v608
    %v682 = vpop.f32.mrf.mxu0
    %v683 = vadd.f32 0.0, %v682
    %v684 = vpop.f32.mrf.mxu0
    %685 = vdwg.mxu0
    %v702 = vunpack.c.l.b16 %v592
    %v703 = vunpack.c.l.b16 %v593
    %v704 = vunpack.c.l.b16 %v594
    %v705 = vunpack.c.l.b16 %v595
    %v706 = vunpack.c.l.b16 %v596
    %v707 = vunpack.c.l.b16 %v597
    %v708 = vunpack.c.l.b16 %v598
    %v709 = vunpack.c.l.b16 %v599
    %v710 = vunpack.c.l.b16 %v600
    %v711 = vunpack.c.l.b16 %v601
    %v712 = vunpack.c.l.b16 %v602
    %v713 = vunpack.c.l.b16 %v603
    %v714 = vunpack.c.l.b16 %v604
    %v715 = vunpack.c.l.b16 %v605
    %v716 = vunpack.c.l.b16 %v606
    %v717 = vunpack.c.l.b16 %v607
    %v718 = vpack.c.b16 %v703, %v702
    %v719 = vpack.c.b16 %v705, %v704
    %v720 = vpack.c.b16 %v707, %v706
    %v721 = vpack.c.b16 %v709, %v708
    %v722 = vpack.c.b16 %v711, %v710
    %v723 = vpack.c.b16 %v713, %v712
    %v724 = vpack.c.b16 %v715, %v714
    %v725 = vpack.c.b16 %v717, %v716
    %734 = vmatpush.bf16.msra.mxu0 %v725
    %735 = vmatpush.bf16.msra.mxu0 %v724
    %736 = vmatpush.bf16.msra.mxu0 %v723
    %737 = vmatpush.bf16.msra.mxu0 %v722
    %738 = vmatpush.bf16.msra.mxu0 %v721
    %739 = vmatpush.bf16.msra.mxu0 %v720
    %740 = vmatpush.bf16.msra.mxu0 %v719
    %741 = vmatpush.bf16.msra.mxu0 %v718
    %742 = vmatmul.bf16.gmra.mxu0 %v591
    %v743 = vpop.f32.mrf.mxu0
    %v744 = vadd.f32 %v683, %v743
    %v745 = vpop.f32.mrf.mxu0
    %746 = vdwg.mxu0
    %v747 = vld [vmem:[#allocation9] sm:$0xf]
    %v748 = vld [vmem:[#allocation18] sm:$0xf]
    %v749 = vld [vmem:[#allocation18 + $0x4] sm:$0xf]
    %v750 = vld [vmem:[#allocation18 + $0x8] sm:$0xf]
    %v751 = vld [vmem:[#allocation18 + $0xc] sm:$0xf]
    %v752 = vld [vmem:[#allocation18 + $0x10] sm:$0xf]
    %v753 = vld [vmem:[#allocation18 + $0x14] sm:$0xf]
    %v754 = vld [vmem:[#allocation18 + $0x18] sm:$0xf]
    %v755 = vld [vmem:[#allocation18 + $0x1c] sm:$0xf]
    %v756 = vld [vmem:[#allocation18 + $0x20] sm:$0xf]
    %v757 = vld [vmem:[#allocation18 + $0x24] sm:$0xf]
    %v758 = vld [vmem:[#allocation18 + $0x28] sm:$0xf]
    %v759 = vld [vmem:[#allocation18 + $0x2c] sm:$0xf]
    %v760 = vld [vmem:[#allocation18 + $0x30] sm:$0xf]
    %v761 = vld [vmem:[#allocation18 + $0x34] sm:$0xf]
    %v762 = vld [vmem:[#allocation18 + $0x38] sm:$0xf]
    %v763 = vld [vmem:[#allocation18 + $0x3c] sm:$0xf]
    %v780 = vunpack.c.l.b16 %v748
    %v781 = vunpack.c.l.b16 %v749
    %v782 = vunpack.c.l.b16 %v750
    %v783 = vunpack.c.l.b16 %v751
    %v784 = vunpack.c.l.b16 %v752
    %v785 = vunpack.c.l.b16 %v753
    %v786 = vunpack.c.l.b16 %v754
    %v787 = vunpack.c.l.b16 %v755
    %v788 = vunpack.c.l.b16 %v756
    %v789 = vunpack.c.l.b16 %v757
    %v790 = vunpack.c.l.b16 %v758
    %v791 = vunpack.c.l.b16 %v759
    %v792 = vunpack.c.l.b16 %v760
    %v793 = vunpack.c.l.b16 %v761
    %v794 = vunpack.c.l.b16 %v762
    %v795 = vunpack.c.l.b16 %v763
    %v796 = vpack.c.b16 %v781, %v780
    %v797 = vpack.c.b16 %v783, %v782
    %v798 = vpack.c.b16 %v785, %v784
    %v799 = vpack.c.b16 %v787, %v786
    %v800 = vpack.c.b16 %v789, %v788
    %v801 = vpack.c.b16 %v791, %v790
    %v802 = vpack.c.b16 %v793, %v792
    %v803 = vpack.c.b16 %v795, %v794
    %812 = vmatpush.bf16.msra.mxu0 %v803
    %813 = vmatpush.bf16.msra.mxu0 %v802
    %814 = vmatpush.bf16.msra.mxu0 %v801
    %815 = vmatpush.bf16.msra.mxu0 %v800
    %816 = vmatpush.bf16.msra.mxu0 %v799
    %817 = vmatpush.bf16.msra.mxu0 %v798
    %818 = vmatpush.bf16.msra.mxu0 %v797
    %819 = vmatpush.bf16.msra.mxu0 %v796
    %820 = vmatmul.bf16.gmra.mxu0 %v747
    %v821 = vpop.f32.mrf.mxu0
    %v822 = vadd.f32 0.0, %v821
    %v823 = vpop.f32.mrf.mxu0
    %824 = vdwg.mxu0
    %v825 = vadd.f32 %v744, %v822
    %v826 = vld [vmem:[%s13] sm:$0x1]
    %v828 = vperm.slane %v826, 0
    %v830 = vadd.f32 %v825, %v828
    %v831 = vmax.f32 %v830, 0.0
    %v832 = vpack.c.bf16 %v831, %v831
    %v833 = vld [vmem:[#allocation19] sm:$0xf]
    %v834 = vld [vmem:[#allocation19 + $0x4] sm:$0xf]
    %v835 = vld [vmem:[#allocation19 + $0x8] sm:$0xf]
    %v836 = vld [vmem:[#allocation19 + $0xc] sm:$0xf]
    %v837 = vld [vmem:[#allocation19 + $0x10] sm:$0xf]
    %v838 = vld [vmem:[#allocation19 + $0x14] sm:$0xf]
    %v839 = vld [vmem:[#allocation19 + $0x18] sm:$0xf]
    %v840 = vld [vmem:[#allocation19 + $0x1c] sm:$0xf]
    %v841 = vld [vmem:[#allocation19 + $0x20] sm:$0xf]
    %v842 = vld [vmem:[#allocation19 + $0x24] sm:$0xf]
    %v843 = vld [vmem:[#allocation19 + $0x28] sm:$0xf]
    %v844 = vld [vmem:[#allocation19 + $0x2c] sm:$0xf]
    %v845 = vld [vmem:[#allocation19 + $0x30] sm:$0xf]
    %v846 = vld [vmem:[#allocation19 + $0x34] sm:$0xf]
    %v847 = vld [vmem:[#allocation19 + $0x38] sm:$0xf]
    %v848 = vld [vmem:[#allocation19 + $0x3c] sm:$0xf]
    %v849 = vld [vmem:[%s15] sm:$0x1]
    %v851 = vperm.slane %v849, 0
    %v869 = vunpack.c.l.b16 %v833
    %v870 = vunpack.c.l.b16 %v834
    %v871 = vunpack.c.l.b16 %v835
    %v872 = vunpack.c.l.b16 %v836
    %v873 = vunpack.c.l.b16 %v837
    %v874 = vunpack.c.l.b16 %v838
    %v875 = vunpack.c.l.b16 %v839
    %v876 = vunpack.c.l.b16 %v840
    %v877 = vunpack.c.l.b16 %v841
    %v878 = vunpack.c.l.b16 %v842
    %v879 = vunpack.c.l.b16 %v843
    %v880 = vunpack.c.l.b16 %v844
    %v881 = vunpack.c.l.b16 %v845
    %v882 = vunpack.c.l.b16 %v846
    %v883 = vunpack.c.l.b16 %v847
    %v884 = vunpack.c.l.b16 %v848
    %v885 = vpack.c.b16 %v870, %v869
    %v886 = vpack.c.b16 %v872, %v871
    %v887 = vpack.c.b16 %v874, %v873
    %v888 = vpack.c.b16 %v876, %v875
    %v889 = vpack.c.b16 %v878, %v877
    %v890 = vpack.c.b16 %v880, %v879
    %v891 = vpack.c.b16 %v882, %v881
    %v892 = vpack.c.b16 %v884, %v883
    %901 = vmatpush.bf16.msra.mxu0 %v892
    %902 = vmatpush.bf16.msra.mxu0 %v891
    %903 = vmatpush.bf16.msra.mxu0 %v890
    %904 = vmatpush.bf16.msra.mxu0 %v889
    %905 = vmatpush.bf16.msra.mxu0 %v888
    %906 = vmatpush.bf16.msra.mxu0 %v887
    %907 = vmatpush.bf16.msra.mxu0 %v886
    %908 = vmatpush.bf16.msra.mxu0 %v885
    %909 = vmatmul.bf16.gmra.mxu0 %v832
    %v910 = vpop.f32.mrf.mxu0
    %v911 = vadd.f32 %v851, %v910
    %v912 = vpop.f32.mrf.mxu0
    %913 = vdwg.mxu0
    %v914 = vxor.u32 %v911, 2147483648
    %v915 = vmul.f32 %v914, 1.442695
    %v916 = vpow.pop %v915
    %v917 = vadd.f32 %v916, 1.0
    %v918 = vrcp.pop %v917
    %v919 = vmul.f32 %v917, %v918
    %v920 = vsub.f32 1.0, %v919
    %v921 = vmul.f32 %v918, %v920
    %v922 = vadd.f32 %v918, %v921
    %vm923 = vweird.f32 %v917
    %vm924 = vweird.f32 %v918
    %vm925 = vmor %vm923, %vm924
    %v926 = vsel %vm925, %v918, %v922
    %v927 = vand.u32 2147483647, %v917
    %vm928 = vcmp.eq.f32.partialorder %v927, 8.507059e+37
    %v929 = vand.u32 %v917, 2147483648
    %v930 = vor.u32 1.1754944e-38, %v929
    %v931 = vsel %vm928, %v930, %v926
    %v932 = vmul.f32 1.0, %v931
    %s933 = sld [smem:[#allocation2]]
    %v934 = vstv %s933
    %v935 = vmul.f32 %v932, %v934
    %s936 = sld [smem:[#allocation2 + $0x1]]
    %v937 = vstv %s936
    %v938 = vadd.f32 %v935, %v937
    %939 = vst [vmem:[#allocation21] sm:$0xff] %v938
    // Predicated region
    $region110: #{tpu_custom_call.1} parent=1 // pred_check
      _
    $region111: #{tpu_custom_call.1} parent=1 // pred_check_branch
      %941 = sbr.rel (0) target = $region113
    $region112: #{tpu_custom_call.1} parent=1 // pred_region
      %943 = vsyncadd [#allocation4], 0
      %s945 = sshll.u32 [#allocation21], 4
      %s946 = int_to_ptr.vmem [resolvable:$true] %s945
      %s947 = sshll.u32 %s16, 4
      %s948 = int_to_ptr.hbm [resolvable:$true] %s947
      %950 = dma.vmem_to_hbm [thread:$0]  %s946, 128, %s948, [#allocation4]
    $region113: #{tpu_custom_call.1} parent=1 // pred_fallthru
      _
    // Predicated region
    $region114: #{tpu_custom_call.1} parent=1 // pred_check
      _
    $region115: #{tpu_custom_call.1} parent=1 // pred_check_branch
      %952 = sbr.rel (0) target = $region117
    $region116: #{tpu_custom_call.1} parent=1 // pred_region
      %954 = dma.done [#allocation4], 128
    $region117: #{tpu_custom_call.1} parent=1 // pred_fallthru
      _
    %955 = vsyncpa [#allocation3], 1
    %956 = vsyncpa [#allocation8], 1
    %957 = vsyncpa [#allocation11], 1
    %958 = vsyncpa [#allocation14], 1
    %959 = vsyncpa [#allocation17], 1
    %960 = vsyncpa [#allocation20], 1
    %961 = vsyncpa [#allocation4], 1
    %962 = vsyncpa [#allocation5], 1

</llo_original>
